<compile_context>
chip_gen: v5e
topology: v5e:2x2
jax: 0.10.0
libtpu: 0.0.40
codegen_flags: <defaults>
</compile_context>

<pallas_src>
import functools

import jax
import jax.numpy as jnp
from jax.experimental import pallas as pl
from jax.experimental.pallas import tpu as pltpu


def _round_up(x, m):
    return (x + m - 1) // m * m


def _vmem_capacity_bytes():
    try:
        return int(pltpu.get_tpu_info().vmem_capacity_bytes)
    except Exception:
        return 64 * 1024 * 1024  # conservative fallback (v7x per-TC VMEM)


def _divisors_le(n, cap):
    divs = []
    d = 1
    while d * d <= n:
        if n % d == 0:
            if d <= cap:
                divs.append(d)
            if n // d <= cap:
                divs.append(n // d)
        d += 1
    return divs


def _pick_tk(d_ff, cap):
    """Largest divisor of d_ff <= cap, preferring lane-aligned (x128) slabs."""
    cap = max(1, min(cap, d_ff))
    divs = _divisors_le(d_ff, cap)
    lane_divs = [d for d in divs if d % 128 == 0]
    if lane_divs:
        return max(lane_divs)
    return max(divs)


def _ffn_kernel_scratch_acc(x_ref, w1_ref, b1_ref, w2_ref, b2_ref, o_ref, acc_ref):
    # Non-f32 output: accumulate in an f32 VMEM scratch resident across k.
    # x_ref:  (tm, d_model)
    # w1_ref: (d_model, tk), b1_ref: (1, tk)
    # w2_ref: (tk, tn),      b2_ref: (1, tn)
    # acc_ref/o_ref: (tm, tn)
    k = pl.program_id(2)

    @pl.when(k == 0)
    def _():
        acc_ref[...] = jnp.zeros_like(acc_ref)

    # First GEMM slab + bias + ReLU (ReLU splits cleanly along d_ff).
    h = jnp.dot(x_ref[...], w1_ref[...], preferred_element_type=jnp.float32)
    h = jnp.maximum(h + b1_ref[...], 0.0)
    # dropout (eval mode) -> identity

    # Second GEMM: accumulate partial sums over the d_ff slabs.
    acc_ref[...] += jnp.dot(h.astype(w2_ref.dtype), w2_ref[...],
                            preferred_element_type=jnp.float32)

    @pl.when(k == pl.num_programs(2) - 1)
    def _():
        o_ref[...] = (acc_ref[...] + b2_ref[...]).astype(o_ref.dtype)


def _ffn_kernel_out_acc(x_ref, w1_ref, b1_ref, w2_ref, b2_ref, o_ref):
    # f32 output: accumulate directly in o_ref (resident across k), no scratch.
    k = pl.program_id(2)

    @pl.when(k == 0)
    def _():
        o_ref[...] = jnp.zeros_like(o_ref)

    h = jnp.dot(x_ref[...], w1_ref[...], preferred_element_type=jnp.float32)
    h = jnp.maximum(h + b1_ref[...], 0.0)
    # dropout (eval mode) -> identity

    o_ref[...] += jnp.dot(h.astype(w2_ref.dtype), w2_ref[...],
                          preferred_element_type=jnp.float32)

    @pl.when(k == pl.num_programs(2) - 1)
    def _():
        o_ref[...] = o_ref[...] + b2_ref[...]


@functools.partial(jax.jit, static_argnames=("tm", "tk"))
def pointerwise_feedforward(x, w1, b1, w2, b2, *, tm=None, tk=None):
    """x: (batch, seq, d_model). w1: (d_model, d_ff), b1: (1, d_ff),
    w2: (d_ff, d_model), b2: (1, d_model). Returns (batch, seq, d_model)."""
    batch, seq, d_model = x.shape
    d_ff = w1.shape[1]
    M = batch * seq
    x2d = x.reshape(M, d_model)

    x_is = jnp.dtype(x.dtype).itemsize
    w1_is = jnp.dtype(w1.dtype).itemsize
    w2_is = jnp.dtype(w2.dtype).itemsize
    b_is = jnp.dtype(b1.dtype).itemsize
    out_dtype = x.dtype
    out_is = jnp.dtype(out_dtype).itemsize
    use_out_acc = jnp.dtype(out_dtype) == jnp.dtype(jnp.float32)

    # --- generation-aware VMEM budget --------------------------------------
    vmem_cap = _vmem_capacity_bytes()
    vmem_limit = max(32 << 20, min(int(vmem_cap * 0.75), vmem_cap - (8 << 20)))
    budget = int(vmem_limit * 0.9)  # planning headroom (semaphores, misc scratch)

    # --- row tile: big enough to clear the weight re-streaming roofline -----
    if tm is None:
        tm_target = 1024 if vmem_cap >= (100 << 20) else 512
    else:
        tm_target = tm
    tm_target = min(tm_target, _round_up(M, 8))
    tm_target = max(8, (tm_target // 8) * 8)

    def tk_cap_for(tm_cand):
        fixed = 2 * tm_cand * d_model * x_is          # x tile, double-buffered
        fixed += 2 * tm_cand * d_model * out_is       # output tile
        if not use_out_acc:
            fixed += tm_cand * d_model * 4            # f32 accumulator scratch
        fixed += 4 * (d_ff + d_model) * 4             # biases (generous upper bound)
        per_tk = 2 * d_model * w1_is + 2 * d_model * w2_is  # w1 + w2 slabs (x2 bufs)
        per_tk += tm_cand * (4 + w2_is)               # hidden (tm, tk) f32 h + cast copy
        return (budget - fixed) // per_tk

    # Shrink tm if even a 128-wide d_ff slab would not fit the budget.
    while tm is None and tm_target > 8 and tk_cap_for(tm_target) < min(d_ff, 128):
        tm_target = max(8, (tm_target // 2 // 8) * 8)

    # Prefer a tm that divides M exactly so no padded HBM copy of x is needed.
    tm_eff = None
    if M % 8 == 0:
        for cand in range(tm_target, 7, -8):
            if M % cand == 0:
                tm_eff = cand
                break
        if tm_eff is not None and tm_eff < max(8, tm_target // 2):
            tm_eff = None  # divisor too small; padding the tail is cheaper
    if tm_eff is None:
        tm_eff = tm_target
    Mp = _round_up(M, tm_eff)
    if Mp != M:
        # TODO(synk): masked ragged last row tile instead of a padded copy.
        x2d = jnp.pad(x2d, ((0, Mp - M), (0, 0)))

    # --- d_ff reduction slab: VMEM-budget aware, capped at 1024 -------------
    if tk is None:
        tk_eff = _pick_tk(d_ff, min(int(tk_cap_for(tm_eff)), 1024))
    else:
        tk_eff = tk
    assert d_ff % tk_eff == 0, "tk must divide d_ff"

    grid_m = Mp // tm_eff
    grid_k = d_ff // tk_eff

    # --- output-column split only for decode-like shapes on the 2-TC part ---
    tn = d_model
    if grid_m == 1 and vmem_cap < (100 << 20) and d_model % 256 == 0:
        tn = d_model // 2
    grid_n = d_model // tn
    grid = (grid_m, grid_n, grid_k)

    # --- cost estimate: count weight re-streaming per row tile --------------
    flops = 2 * Mp * d_model * d_ff * (grid_n + 1)   # 1st GEMM (x grid_n) + 2nd GEMM
    bytes_accessed = (
        Mp * d_model * x_is                              # x (fetched once per row tile)
        + grid_m * grid_n * d_model * d_ff * w1_is       # w1 re-streamed per (i, n)
        + grid_m * d_ff * d_model * w2_is                # w2 re-streamed per row tile
        + grid_m * grid_n * d_ff * b_is                  # b1
        + grid_m * grid_n * tn * b_is                    # b2
        + Mp * d_model * out_is                          # output
    )
    cost = pl.CostEstimate(flops=int(flops), transcendentals=0,
                           bytes_accessed=int(bytes_accessed))

    if use_out_acc:
        kernel = _ffn_kernel_out_acc
        scratch = []
    else:
        kernel = _ffn_kernel_scratch_acc
        scratch = [pltpu.VMEM((tm_eff, tn), jnp.float32)]

    out2d = pl.pallas_call(
        kernel,
        out_shape=jax.ShapeDtypeStruct((Mp, d_model), out_dtype),
        grid_spec=pltpu.PrefetchScalarGridSpec(
            num_scalar_prefetch=0,
            grid=grid,
            in_specs=[
                pl.BlockSpec((tm_eff, d_model), lambda i, n, k: (i, 0)),  # x tile
                pl.BlockSpec((d_model, tk_eff), lambda i, n, k: (0, k)),  # w1 slab
                pl.BlockSpec((1, tk_eff),       lambda i, n, k: (0, k)),  # b1 slab
                pl.BlockSpec((tk_eff, tn),      lambda i, n, k: (k, n)),  # w2 slab
                pl.BlockSpec((1, tn),           lambda i, n, k: (0, n)),  # b2
            ],
            out_specs=pl.BlockSpec((tm_eff, tn), lambda i, n, k: (i, n)),
            scratch_shapes=scratch,
        ),
        compiler_params=pltpu.CompilerParams(
            dimension_semantics=("parallel", "parallel", "arbitrary"),
            vmem_limit_bytes=int(vmem_limit),
        ),
        cost_estimate=cost,
    )(x2d, w1, b1, w2, b2)

    if Mp != M:
        out2d = out2d[:M]
    return out2d.reshape(batch, seq, d_model)


def reference_ffn(x, w1, b1, w2, b2):
    h = jnp.maximum(x @ w1 + b1, 0.0)
    return h @ w2 + b2


if __name__ == "__main__":
    batch, seq, d_model, d_ff = 2, 8, 32, 64

    key = jax.random.PRNGKey(0)
    kx, k1, kb1, k2, kb2 = jax.random.split(key, 5)

    x = jax.random.normal(kx, (batch, seq, d_model), dtype=jnp.float32)
    # deterministic parameter init (shapes follow nn.Linear(d_model, d_ff) etc.)
    w1 = jax.random.normal(k1, (d_model, d_ff), dtype=jnp.float32) * 0.05
    b1 = jax.random.normal(kb1, (1, d_ff), dtype=jnp.float32) * 0.05
    w2 = jax.random.normal(k2, (d_ff, d_model), dtype=jnp.float32) * 0.05
    b2 = jax.random.normal(kb2, (1, d_model), dtype=jnp.float32) * 0.05

    out = pointerwise_feedforward(x, w1, b1, w2, b2)
    out = jax.block_until_ready(out)

    ref = reference_ffn(x.reshape(-1, d_model), w1, b1, w2, b2).reshape(
        batch, seq, d_model)
    assert out.shape == (batch, seq, d_model)
    assert jnp.allclose(out, ref, atol=1e-5, rtol=1e-5), "mismatch vs reference"

    print("KERNEL_OK")
</pallas_src>

<mosaic_0001>
module attributes {stable_mosaic.version = 11 : i64} {
  func.func @_ffn_kernel_out_acc(%arg0: i32, %arg1: i32, %arg2: i32, %arg3: memref<16x32xf32, #tpu.memory_space<vmem>>, %arg4: memref<32x64xf32, #tpu.memory_space<vmem>>, %arg5: memref<1x64xf32, #tpu.memory_space<vmem>>, %arg6: memref<64x32xf32, #tpu.memory_space<vmem>>, %arg7: memref<1x32xf32, #tpu.memory_space<vmem>>, %arg8: memref<16x32xf32, #tpu.memory_space<vmem>>) attributes {dimension_semantics = [#tpu.dimension_semantics<parallel>, #tpu.dimension_semantics<parallel>, #tpu.dimension_semantics<arbitrary>], iteration_bounds = array<i64: 1, 1, 1>, scalar_prefetch = 0 : i64, scratch_operands = 0 : i64, tpu.core_type = #tpu.core_type<tc>, window_params = [{transform_indices = @transform_0, window_bounds = array<i64: 16, 32>}, {transform_indices = @transform_1, window_bounds = array<i64: 32, 64>}, {transform_indices = @transform_2, window_bounds = array<i64: 1, 64>}, {transform_indices = @transform_3, window_bounds = array<i64: 64, 32>}, {transform_indices = @transform_4, window_bounds = array<i64: 1, 32>}, {transform_indices = @transform_5, window_bounds = array<i64: 16, 32>}]} {
    %c0_i32 = arith.constant 0 : i32
    %0 = arith.cmpi eq, %arg2, %c0_i32 : i32
    %1 = arith.extui %0 : i1 to i32
    %c0_i32_0 = arith.constant 0 : i32
    %2 = arith.cmpi ne, %1, %c0_i32_0 : i32
    scf.if %2 {
      %cst_16 = arith.constant 0.000000e+00 : f32
      %19 = vector.broadcast %cst_16 : f32 to vector<16x32xf32>
      %c0_17 = arith.constant 0 : index
      %c0_18 = arith.constant 0 : index
      %20 = vector.load %arg8[%c0_17, %c0_18] : memref<16x32xf32, #tpu.memory_space<vmem>>, vector<16x32xf32>
      tpu.vector_store %arg8[%c0_17, %c0_18], %19 {strides = array<i32>} : memref<16x32xf32, #tpu.memory_space<vmem>>, vector<16x32xf32>,
    } else {
    }
    %c0 = arith.constant 0 : index
    %c0_1 = arith.constant 0 : index
    %3 = vector.load %arg3[%c0, %c0_1] : memref<16x32xf32, #tpu.memory_space<vmem>>, vector<16x32xf32>
    %c0_2 = arith.constant 0 : index
    %c0_3 = arith.constant 0 : index
    %4 = vector.load %arg4[%c0_2, %c0_3] : memref<32x64xf32, #tpu.memory_space<vmem>>, vector<32x64xf32>
    %cst = arith.constant dense<0.000000e+00> : vector<16x64xf32>
    %5 = tpu.matmul %3, %4, %cst {dimension_numbers = #tpu.dot_dimension_numbers<[1], [0], [0], [1], [0, 0, 1, 1], [], []>} : vector<16x32xf32>, vector<32x64xf32>, vector<16x64xf32> -> vector<16x64xf32>
    %c0_4 = arith.constant 0 : index
    %c0_5 = arith.constant 0 : index
    %6 = vector.load %arg5[%c0_4, %c0_5] : memref<1x64xf32, #tpu.memory_space<vmem>>, vector<1x64xf32>
    %7 = vector.broadcast %6 : vector<1x64xf32> to vector<16x64xf32>
    %8 = arith.addf %5, %7 : vector<16x64xf32>
    %cst_6 = arith.constant 0.000000e+00 : f32
    %9 = vector.broadcast %cst_6 : f32 to vector<16x64xf32>
    %10 = arith.maximumf %8, %9 : vector<16x64xf32>
    %c0_7 = arith.constant 0 : index
    %c0_8 = arith.constant 0 : index
    %11 = vector.load %arg8[%c0_7, %c0_8] : memref<16x32xf32, #tpu.memory_space<vmem>>, vector<16x32xf32>
    %c0_9 = arith.constant 0 : index
    %c0_10 = arith.constant 0 : index
    %12 = vector.load %arg6[%c0_9, %c0_10] : memref<64x32xf32, #tpu.memory_space<vmem>>, vector<64x32xf32>
    %cst_11 = arith.constant dense<0.000000e+00> : vector<16x32xf32>
    %13 = tpu.matmul %10, %12, %cst_11 {dimension_numbers = #tpu.dot_dimension_numbers<[1], [0], [0], [1], [0, 0, 1, 1], [], []>} : vector<16x64xf32>, vector<64x32xf32>, vector<16x32xf32> -> vector<16x32xf32>
    %14 = arith.addf %11, %13 : vector<16x32xf32>
    %c0_12 = arith.constant 0 : index
    %c0_13 = arith.constant 0 : index
    %15 = vector.load %arg8[%c0_12, %c0_13] : memref<16x32xf32, #tpu.memory_space<vmem>>, vector<16x32xf32>
    tpu.vector_store %arg8[%c0_12, %c0_13], %14 {strides = array<i32>} : memref<16x32xf32, #tpu.memory_space<vmem>>, vector<16x32xf32>,
    %c0_i32_14 = arith.constant 0 : i32
    %16 = arith.cmpi eq, %arg2, %c0_i32_14 : i32
    %17 = arith.extui %16 : i1 to i32
    %c0_i32_15 = arith.constant 0 : i32
    %18 = arith.cmpi ne, %17, %c0_i32_15 : i32
    scf.if %18 {
      %c0_16 = arith.constant 0 : index
      %c0_17 = arith.constant 0 : index
      %19 = vector.load %arg8[%c0_16, %c0_17] : memref<16x32xf32, #tpu.memory_space<vmem>>, vector<16x32xf32>
      %c0_18 = arith.constant 0 : index
      %c0_19 = arith.constant 0 : index
      %20 = vector.load %arg7[%c0_18, %c0_19] : memref<1x32xf32, #tpu.memory_space<vmem>>, vector<1x32xf32>
      %21 = vector.broadcast %20 : vector<1x32xf32> to vector<16x32xf32>
      %22 = arith.addf %19, %21 : vector<16x32xf32>
      %c0_20 = arith.constant 0 : index
      %c0_21 = arith.constant 0 : index
      %23 = vector.load %arg8[%c0_20, %c0_21] : memref<16x32xf32, #tpu.memory_space<vmem>>, vector<16x32xf32>
      tpu.vector_store %arg8[%c0_20, %c0_21], %22 {strides = array<i32>} : memref<16x32xf32, #tpu.memory_space<vmem>>, vector<16x32xf32>,
    } else {
    }
    return
  }
  func.func @transform_0(%arg0: i32, %arg1: i32, %arg2: i32) -> (i32, i32) {
    %c0_i32 = arith.constant 0 : i32
    %c0_i32_0 = arith.constant 0 : i32
    return %arg0, %c0_i32 : i32, i32
  }
  func.func @transform_1(%arg0: i32, %arg1: i32, %arg2: i32) -> (i32, i32) {
    %c0_i32 = arith.constant 0 : i32
    %c0_i32_0 = arith.constant 0 : i32
    return %c0_i32, %arg2 : i32, i32
  }
  func.func @transform_2(%arg0: i32, %arg1: i32, %arg2: i32) -> (i32, i32) {
    %c0_i32 = arith.constant 0 : i32
    %c0_i32_0 = arith.constant 0 : i32
    return %c0_i32, %arg2 : i32, i32
  }
  func.func @transform_3(%arg0: i32, %arg1: i32, %arg2: i32) -> (i32, i32) {
    %c0_i32 = arith.constant 0 : i32
    return %arg2, %arg1 : i32, i32
  }
  func.func @transform_4(%arg0: i32, %arg1: i32, %arg2: i32) -> (i32, i32) {
    %c0_i32 = arith.constant 0 : i32
    %c0_i32_0 = arith.constant 0 : i32
    return %c0_i32, %arg1 : i32, i32
  }
  func.func @transform_5(%arg0: i32, %arg1: i32, %arg2: i32) -> (i32, i32) {
    %c0_i32 = arith.constant 0 : i32
    return %arg0, %arg1 : i32, i32
  }
}

</mosaic_0001>

<llo_original>
// kernel: pointerwise_feedforward.1
$region0: #{pointerwise_feedforward.1}
  #allocation0 [shape = 'u32[]', space=smem, size = 0x4, offset = 0x4, fixed_abs, tag = 'smem constant byte address 0x4 - core index']
  #allocation1 [shape = 'u32[72,128]{1,0:T(1,128)}', space=vmem, size = 0x9000, scoped, tag = 'internal scratch']
  %s0 = inlined_call_operand.vmem [shape: f32[16,32], index: 0, kind: input, shape index: {}]
  %s1 = inlined_call_operand.vmem [shape: f32[32,64], index: 1, kind: input, shape index: {}]
  %s2 = inlined_call_operand.vmem [shape: f32[1,64], index: 2, kind: input, shape index: {}]
  %s3 = inlined_call_operand.vmem [shape: f32[64,32], index: 3, kind: input, shape index: {}]
  %s4 = inlined_call_operand.vmem [shape: f32[1,32], index: 4, kind: input, shape index: {}]
  %s5 = inlined_call_operand.hbm [shape: f32[16,32], index: 5, kind: output, shape index: {}]
  %s6 = sld [smem:[#allocation0]]
  $region38: #{pointerwise_feedforward.1} parent=0
    _
  %s8 = ssub.s32 1, %s6
  %s9 = scalar_select 0, %s8, %s6
  $region1: #{pointerwise_feedforward.1} parent=0
    #allocation2 [shape = 'u8[8192]{0}', space=vmem, size = 0x2000, scoped, tag = 'output window, operand 0, single buffered']
    #allocation3 [shape = 's32[1]{0}', space=sflag, size = 0x4, scoped, tag = 'scoped memory for pointerwise_feedforward.1']
    %10 = vsyncpa [#allocation3], 0
    // Predicated region
    $region2: #{pointerwise_feedforward.1} parent=1 // pred_check
      _
    $region3: #{pointerwise_feedforward.1} parent=1 // pred_check_branch
      %12 = sbr.rel (0) target = $region5
    $region4: #{pointerwise_feedforward.1} parent=1 // pred_region
      _
    $region5: #{pointerwise_feedforward.1} parent=1 // pred_fallthru
      _
    // Predicated region
    $region6: #{pointerwise_feedforward.1} parent=1 // pred_check
      _
    $region7: #{pointerwise_feedforward.1} parent=1 // pred_check_branch
      %14 = sbr.rel (0) target = $region9
    $region8: #{pointerwise_feedforward.1} parent=1 // pred_region
      _
    $region9: #{pointerwise_feedforward.1} parent=1 // pred_fallthru
      _
    // Predicated region
    $region10: #{pointerwise_feedforward.1} parent=1 // pred_check
      _
    $region11: #{pointerwise_feedforward.1} parent=1 // pred_check_branch
      %16 = sbr.rel (0) target = $region13
    $region12: #{pointerwise_feedforward.1} parent=1 // pred_region
      _
    $region13: #{pointerwise_feedforward.1} parent=1 // pred_fallthru
      _
    // Predicated region
    $region14: #{pointerwise_feedforward.1} parent=1 // pred_check
      _
    $region15: #{pointerwise_feedforward.1} parent=1 // pred_check_branch
      %18 = sbr.rel (0) target = $region17
    $region16: #{pointerwise_feedforward.1} parent=1 // pred_region
      _
    $region17: #{pointerwise_feedforward.1} parent=1 // pred_fallthru
      _
    // Predicated region
    $region18: #{pointerwise_feedforward.1} parent=1 // pred_check
      _
    $region19: #{pointerwise_feedforward.1} parent=1 // pred_check_branch
      %20 = sbr.rel (0) target = $region21
    $region20: #{pointerwise_feedforward.1} parent=1 // pred_region
      _
    $region21: #{pointerwise_feedforward.1} parent=1 // pred_fallthru
      _
    %p21 = scmp.eq.s32.totalorder 0, 0
    // Predicated region
    $region22: #{pointerwise_feedforward.1} parent=1 // pred_check
      %p22 = pneg %p21
    $region23: #{pointerwise_feedforward.1} parent=1 // pred_check_branch
      %24 = sbr.rel (%p22) target = $region25
    $region24: #{pointerwise_feedforward.1} parent=1 // pred_region
      %vm25 = vcmask 261120
      %26 = vst.msk [vmem:[#allocation2] sm:$0xff] %vm25, 0.0
      %27 = vst.msk [vmem:[#allocation2 + $0x8] sm:$0xff] %vm25, 0.0
    $region25: #{pointerwise_feedforward.1} parent=1 // pred_fallthru
      _
    %v28 = vld [vmem:[%s0] sm:$0xff]
    %v29 = vld [vmem:[%s0 + $0x8] sm:$0xff]
    %v30 = vld [vmem:[%s1] sm:$0xff]
    %v31 = vld [vmem:[%s1 + $0x8] sm:$0xff]
    %v32 = vld [vmem:[%s1 + $0x10] sm:$0xff]
    %v33 = vld [vmem:[%s1 + $0x18] sm:$0xff]
    %v34 = vld [vmem:[%s2] sm:$0x1]
    %v36 = vperm.slane %v34, 0
    %vm38 = vcmask 261120
    %v40 = vsel %vm38, %v28, 0
    %v43 = vsel %vm38, %v29, 0
    %45 = vmatpush.msra.mxu0 0.0
    %46 = vmatpush.msra.mxu0 0.0
    %47 = vmatpush.msra.mxu0 0.0
    %48 = vmatpush.msra.mxu0 0.0
    %49 = vmatpush.msra.mxu0 0.0
    %50 = vmatpush.msra.mxu0 0.0
    %51 = vmatpush.msra.mxu0 0.0
    %52 = vmatpush.msra.mxu0 0.0
    %53 = vmatpush.msra.mxu0 0.0
    %54 = vmatpush.msra.mxu0 0.0
    %55 = vmatpush.msra.mxu0 0.0
    %56 = vmatpush.msra.mxu0 0.0
    %57 = vmatpush.msra.mxu0 %v33
    %58 = vmatpush.msra.mxu0 %v32
    %59 = vmatpush.msra.mxu0 %v31
    %60 = vmatpush.msra.mxu0 %v30
    %61 = vmatmul.f32.gmra.mxu0 %v40
    %v62 = vpop.f32.mrf.mxu0
    %v63 = vadd.f32 %v36, %v62
    %64 = vmatmul.f32.gmra.mxu0 %v43
    %v65 = vpop.f32.mrf.mxu0
    %v66 = vadd.f32 %v36, %v65
    %67 = vdwg.mxu0
    %v68 = vmax.f32 %v63, 0.0
    %v69 = vmax.f32 %v66, 0.0
    %v70 = vld [vmem:[#allocation2] sm:$0xff]
    %v71 = vld [vmem:[#allocation2 + $0x8] sm:$0xff]
    %v72 = vld [vmem:[%s3] sm:$0xff]
    %v73 = vld [vmem:[%s3 + $0x8] sm:$0xff]
    %v74 = vld [vmem:[%s3 + $0x10] sm:$0xff]
    %v75 = vld [vmem:[%s3 + $0x18] sm:$0xff]
    %v76 = vld [vmem:[%s3 + $0x20] sm:$0xff]
    %v77 = vld [vmem:[%s3 + $0x28] sm:$0xff]
    %v78 = vld [vmem:[%s3 + $0x30] sm:$0xff]
    %v79 = vld [vmem:[%s3 + $0x38] sm:$0xff]
    %vm80 = vcmask 523264
    %v82 = vsel %vm80, %v68, 0
    %v85 = vsel %vm80, %v69, 0
    %87 = vmatpush.msra.mxu0 0.0
    %88 = vmatpush.msra.mxu0 0.0
    %89 = vmatpush.msra.mxu0 0.0
    %90 = vmatpush.msra.mxu0 0.0
    %91 = vmatpush.msra.mxu0 0.0
    %92 = vmatpush.msra.mxu0 0.0
    %93 = vmatpush.msra.mxu0 0.0
    %94 = vmatpush.msra.mxu0 0.0
    %95 = vmatpush.msra.mxu0 %v79
    %96 = vmatpush.msra.mxu0 %v78
    %97 = vmatpush.msra.mxu0 %v77
    %98 = vmatpush.msra.mxu0 %v76
    %99 = vmatpush.msra.mxu0 %v75
    %100 = vmatpush.msra.mxu0 %v74
    %101 = vmatpush.msra.mxu0 %v73
    %102 = vmatpush.msra.mxu0 %v72
    %103 = vmatmul.f32.gmra.mxu0 %v82
    %v104 = vpop.f32.mrf.mxu0
    %v105 = vadd.f32 0.0, %v104
    %106 = vmatmul.f32.gmra.mxu0 %v85
    %v107 = vpop.f32.mrf.mxu0
    %v108 = vadd.f32 0.0, %v107
    %109 = vdwg.mxu0
    %v110 = vadd.f32 %v70, %v105
    %v111 = vadd.f32 %v71, %v108
    %112 = vst.msk [vmem:[#allocation2] sm:$0xff] %vm38, %v110
    %113 = vst.msk [vmem:[#allocation2 + $0x8] sm:$0xff] %vm38, %v111
    // Predicated region
    $region26: #{pointerwise_feedforward.1} parent=1 // pred_check
      %p114 = pneg %p21
    $region27: #{pointerwise_feedforward.1} parent=1 // pred_check_branch
      %116 = sbr.rel (%p114) target = $region29
    $region28: #{pointerwise_feedforward.1} parent=1 // pred_region
      %v117 = vld [vmem:[#allocation2] sm:$0xff]
      %v118 = vld [vmem:[#allocation2 + $0x8] sm:$0xff]
      %v119 = vld [vmem:[%s4] sm:$0x1]
      %v121 = vperm.slane %v119, 0
      %v123 = vadd.f32 %v117, %v121
      %v124 = vadd.f32 %v118, %v121
      %125 = vst.msk [vmem:[#allocation2] sm:$0xff] %vm38, %v123
      %126 = vst.msk [vmem:[#allocation2 + $0x8] sm:$0xff] %vm38, %v124
    $region29: #{pointerwise_feedforward.1} parent=1 // pred_fallthru
      _
    // Predicated region
    $region30: #{pointerwise_feedforward.1} parent=1 // pred_check
      _
    $region31: #{pointerwise_feedforward.1} parent=1 // pred_check_branch
      %128 = sbr.rel (0) target = $region33
    $region32: #{pointerwise_feedforward.1} parent=1 // pred_region
      %130 = vsyncadd [#allocation3], 0
      %s131 = sshll.u32 [#allocation2], 4
      %s132 = int_to_ptr.vmem [resolvable:$true] %s131
      %s133 = sshll.u32 %s5, 4
      %s134 = int_to_ptr.hbm [resolvable:$true] %s133
      %139 = dma.vmem_to_hbm [thread:$0]  %s132, 256, %s134, [#allocation3], 128, 128, 8
    $region33: #{pointerwise_feedforward.1} parent=1 // pred_fallthru
      _
    // Predicated region
    $region34: #{pointerwise_feedforward.1} parent=1 // pred_check
      _
    $region35: #{pointerwise_feedforward.1} parent=1 // pred_check_branch
      %141 = sbr.rel (0) target = $region37
    $region36: #{pointerwise_feedforward.1} parent=1 // pred_region
      %143 = dma.done [#allocation3], 256
    $region37: #{pointerwise_feedforward.1} parent=1 // pred_fallthru
      _
    %144 = vsyncpa [#allocation3], 1

</llo_original>
